<compile_context>
chip_gen: v7x
topology: tpu7x:2x2x1
jax: 0.10.0
libtpu: 0.0.40
codegen_flags: <defaults>
</compile_context>

<pallas_src>
import jax
import jax.numpy as jnp
from jax.experimental import pallas as pl
from jax.experimental.pallas import tpu as pltpu


def mlp_kernel(x_ref, w1_ref, b1_ref, w2_ref, b2_ref, o_ref):
    """Fused Linear -> ReLU -> Linear with batch on the lane axis.

    x_ref  : (in_size, bm)      VMEM  -- bm batch elements on lanes
    w1_ref : (in_size, hidden)  SMEM  -- scalar weights
    b1_ref : (hidden,)          SMEM
    w2_ref : (hidden, out)      SMEM
    b2_ref : (out,)             SMEM
    o_ref  : (out, bm)          VMEM  -- lane-dense output block
    """
    in_size, bm = x_ref.shape
    hidden = w1_ref.shape[1]
    out_size = o_ref.shape[0]

    # One (1, bm) lane-vector per input feature.
    x_rows = [x_ref[i:i + 1, :] for i in range(in_size)]

    # Output accumulators, one (1, bm) lane-vector per output feature,
    # initialised with the layer-2 bias (scalar broadcast from SMEM).
    acc = [jnp.full((1, bm), b2_ref[o], dtype=jnp.float32)
           for o in range(out_size)]

    # For each hidden unit j (static unroll, hidden=10):
    #   h_j = relu(sum_i w1[i,j] * x[i,:] + b1[j])      -- VPU scalar*vector FMAs
    #   y_o += w2[j,o] * h_j                            -- VPU scalar*vector FMA
    for j in range(hidden):
        h = x_rows[0] * w1_ref[0, j]
        for i in range(1, in_size):
            h = h + x_rows[i] * w1_ref[i, j]
        h = jnp.maximum(h + b1_ref[j], 0.0)
        for o in range(out_size):
            acc[o] = acc[o] + h * w2_ref[j, o]

    y = acc[0] if out_size == 1 else jnp.concatenate(acc, axis=0)
    o_ref[...] = y.astype(o_ref.dtype)


def _round_up(n, m):
    return ((n + m - 1) // m) * m


def simple_nn_forward_t(x_t, w1, b1, w2, b2, *, bm=None):
    """Lane-dense (kernel-native) forward pass.

    x_t : (in_size, B)      float32 -- batch on the trailing (lane) axis
    w1  : (in_size, hidden) float32 (transposed vs. PyTorch's (hidden, in))
    b1  : (hidden,)         float32
    w2  : (hidden, out)     float32 (transposed vs. PyTorch's (out, hidden))
    b2  : (out,)            float32
    returns (out, B) float32
    """
    in_size, B = x_t.shape
    out_size = w2.shape[1]

    if bm is None:
        if B <= 2048:
            # Tiny batch: one grid step, block == full array (the (8,128)
            # divisibility rule does not apply when the block spans the axis).
            bm = B
        else:
            # Large batch: 128-multiple lane-dense tiles, >= 2 "parallel" grid
            # steps so v7x's two TensorCores both get work, capped at 16K lanes
            # (a (2, 16K) f32 tile is ~512 KiB sublane-padded, comfortably
            # inside the scoped VMEM default on v5e/v6e/v7x even double-buffered).
            bm = min(16384, _round_up(pl.cdiv(B, 2), 128))
    grid = (pl.cdiv(B, bm),)

    smem = pltpu.MemorySpace.SMEM
    return pl.pallas_call(
        mlp_kernel,
        out_shape=jax.ShapeDtypeStruct((out_size, B), x_t.dtype),
        grid=grid,
        in_specs=[
            pl.BlockSpec((in_size, bm), lambda i: (0, i)),   # x batch tile (lanes)
            pl.BlockSpec(memory_space=smem),                 # w1 scalars
            pl.BlockSpec(memory_space=smem),                 # b1 scalars
            pl.BlockSpec(memory_space=smem),                 # w2 scalars
            pl.BlockSpec(memory_space=smem),                 # b2 scalars
        ],
        out_specs=pl.BlockSpec((out_size, bm), lambda i: (0, i)),  # lane-dense
        compiler_params=pltpu.CompilerParams(
            dimension_semantics=("parallel",),
        ),
    )(x_t, w1, b1, w2, b2)


def simple_nn_forward(x, w1, b1, w2, b2, *, bm=None):
    """Module-compatible forward: x (B, in_size) -> (B, out_size).

    Thin wrapper over the lane-dense kernel.  For a hot path, keep activations
    in (features, batch) layout and call simple_nn_forward_t directly to avoid
    the two tiny transposes.
    """
    y_t = simple_nn_forward_t(x.T, w1, b1, w2, b2, bm=bm)
    return y_t.T


if __name__ == "__main__":
    # Module dims: input_size=2, hidden_size=10, output_size=1
    input_size, hidden_size, output_size = 2, 10, 1
    batch = 8

    key = jax.random.PRNGKey(0)
    kx, kw1, kb1, kw2, kb2 = jax.random.split(key, 5)

    x = jax.random.normal(kx, (batch, input_size), dtype=jnp.float32)

    # PyTorch nn.Linear default init: U(-1/sqrt(fan_in), 1/sqrt(fan_in))
    bound1 = 1.0 / (input_size ** 0.5)
    w1 = jax.random.uniform(kw1, (input_size, hidden_size),
                            minval=-bound1, maxval=bound1, dtype=jnp.float32)
    b1 = jax.random.uniform(kb1, (hidden_size,),
                            minval=-bound1, maxval=bound1, dtype=jnp.float32)

    bound2 = 1.0 / (hidden_size ** 0.5)
    w2 = jax.random.uniform(kw2, (hidden_size, output_size),
                            minval=-bound2, maxval=bound2, dtype=jnp.float32)
    b2 = jax.random.uniform(kb2, (output_size,),
                            minval=-bound2, maxval=bound2, dtype=jnp.float32)

    out = simple_nn_forward(x, w1, b1, w2, b2)
    out = jax.block_until_ready(out)

    # Pure-JAX reference check
    ref = jnp.maximum(x @ w1 + b1[None, :], 0.0) @ w2 + b2[None, :]
    assert out.shape == (batch, output_size)
    assert jnp.allclose(out, ref, atol=1e-5, rtol=1e-5)

    print("KERNEL_OK")
</pallas_src>

<mosaic_0001>
module attributes {stable_mosaic.version = 11 : i64} {
  func.func @mlp_kernel(%arg0: i32, %arg1: memref<2x8xf32, #tpu.memory_space<vmem>>, %arg2: memref<2x10xf32, #tpu.memory_space<smem>>, %arg3: memref<10xf32, #tpu.memory_space<smem>>, %arg4: memref<10x1xf32, #tpu.memory_space<smem>>, %arg5: memref<1xf32, #tpu.memory_space<smem>>, %arg6: memref<1x8xf32, #tpu.memory_space<vmem>>) attributes {dimension_semantics = [#tpu.dimension_semantics<parallel>], iteration_bounds = array<i64: 1>, scalar_prefetch = 0 : i64, scratch_operands = 0 : i64, tpu.core_type = #tpu.core_type<tc>, window_params = [{transform_indices = @transform_0, window_bounds = array<i64: 2, 8>}, {transform_indices = @transform_1, window_bounds = array<i64: 2, 10>}, {transform_indices = @transform_2, window_bounds = array<i64: 10>}, {transform_indices = @transform_3, window_bounds = array<i64: 10, 1>}, {transform_indices = @transform_4, window_bounds = array<i64: 1>}, {transform_indices = @transform_5, window_bounds = array<i64: 1, 8>}]} {
    %c0 = arith.constant 0 : index
    %c0_0 = arith.constant 0 : index
    %0 = vector.load %arg1[%c0, %c0_0] : memref<2x8xf32, #tpu.memory_space<vmem>>, vector<1x8xf32>
    %c1 = arith.constant 1 : index
    %c0_1 = arith.constant 0 : index
    %1 = vector.load %arg1[%c1, %c0_1] : memref<2x8xf32, #tpu.memory_space<vmem>>, vector<1x8xf32>
    %c0_2 = arith.constant 0 : index
    %2 = memref.load %arg5[%c0_2] : memref<1xf32, #tpu.memory_space<smem>>
    %3 = vector.broadcast %2 : f32 to vector<1x8xf32>
    %c0_3 = arith.constant 0 : index
    %c0_4 = arith.constant 0 : index
    %4 = memref.load %arg2[%c0_3, %c0_4] : memref<2x10xf32, #tpu.memory_space<smem>>
    %5 = vector.broadcast %4 : f32 to vector<1x8xf32>
    %6 = arith.mulf %0, %5 : vector<1x8xf32>
    %c1_5 = arith.constant 1 : index
    %c0_6 = arith.constant 0 : index
    %7 = memref.load %arg2[%c1_5, %c0_6] : memref<2x10xf32, #tpu.memory_space<smem>>
    %8 = vector.broadcast %7 : f32 to vector<1x8xf32>
    %9 = arith.mulf %1, %8 : vector<1x8xf32>
    %10 = arith.addf %6, %9 : vector<1x8xf32>
    %c0_7 = arith.constant 0 : index
    %11 = memref.load %arg3[%c0_7] : memref<10xf32, #tpu.memory_space<smem>>
    %12 = vector.broadcast %11 : f32 to vector<1x8xf32>
    %13 = arith.addf %10, %12 : vector<1x8xf32>
    %cst = arith.constant 0.000000e+00 : f32
    %14 = vector.broadcast %cst : f32 to vector<1x8xf32>
    %15 = arith.maximumf %13, %14 : vector<1x8xf32>
    %c0_8 = arith.constant 0 : index
    %c0_9 = arith.constant 0 : index
    %16 = memref.load %arg4[%c0_8, %c0_9] : memref<10x1xf32, #tpu.memory_space<smem>>
    %17 = vector.broadcast %16 : f32 to vector<1x8xf32>
    %18 = arith.mulf %15, %17 : vector<1x8xf32>
    %19 = arith.addf %3, %18 : vector<1x8xf32>
    %c0_10 = arith.constant 0 : index
    %c1_11 = arith.constant 1 : index
    %20 = memref.load %arg2[%c0_10, %c1_11] : memref<2x10xf32, #tpu.memory_space<smem>>
    %21 = vector.broadcast %20 : f32 to vector<1x8xf32>
    %22 = arith.mulf %0, %21 : vector<1x8xf32>
    %c1_12 = arith.constant 1 : index
    %c1_13 = arith.constant 1 : index
    %23 = memref.load %arg2[%c1_12, %c1_13] : memref<2x10xf32, #tpu.memory_space<smem>>
    %24 = vector.broadcast %23 : f32 to vector<1x8xf32>
    %25 = arith.mulf %1, %24 : vector<1x8xf32>
    %26 = arith.addf %22, %25 : vector<1x8xf32>
    %c1_14 = arith.constant 1 : index
    %27 = memref.load %arg3[%c1_14] : memref<10xf32, #tpu.memory_space<smem>>
    %28 = vector.broadcast %27 : f32 to vector<1x8xf32>
    %29 = arith.addf %26, %28 : vector<1x8xf32>
    %cst_15 = arith.constant 0.000000e+00 : f32
    %30 = vector.broadcast %cst_15 : f32 to vector<1x8xf32>
    %31 = arith.maximumf %29, %30 : vector<1x8xf32>
    %c1_16 = arith.constant 1 : index
    %c0_17 = arith.constant 0 : index
    %32 = memref.load %arg4[%c1_16, %c0_17] : memref<10x1xf32, #tpu.memory_space<smem>>
    %33 = vector.broadcast %32 : f32 to vector<1x8xf32>
    %34 = arith.mulf %31, %33 : vector<1x8xf32>
    %35 = arith.addf %19, %34 : vector<1x8xf32>
    %c0_18 = arith.constant 0 : index
    %c2 = arith.constant 2 : index
    %36 = memref.load %arg2[%c0_18, %c2] : memref<2x10xf32, #tpu.memory_space<smem>>
    %37 = vector.broadcast %36 : f32 to vector<1x8xf32>
    %38 = arith.mulf %0, %37 : vector<1x8xf32>
    %c1_19 = arith.constant 1 : index
    %c2_20 = arith.constant 2 : index
    %39 = memref.load %arg2[%c1_19, %c2_20] : memref<2x10xf32, #tpu.memory_space<smem>>
    %40 = vector.broadcast %39 : f32 to vector<1x8xf32>
    %41 = arith.mulf %1, %40 : vector<1x8xf32>
    %42 = arith.addf %38, %41 : vector<1x8xf32>
    %c2_21 = arith.constant 2 : index
    %43 = memref.load %arg3[%c2_21] : memref<10xf32, #tpu.memory_space<smem>>
    %44 = vector.broadcast %43 : f32 to vector<1x8xf32>
    %45 = arith.addf %42, %44 : vector<1x8xf32>
    %cst_22 = arith.constant 0.000000e+00 : f32
    %46 = vector.broadcast %cst_22 : f32 to vector<1x8xf32>
    %47 = arith.maximumf %45, %46 : vector<1x8xf32>
    %c2_23 = arith.constant 2 : index
    %c0_24 = arith.constant 0 : index
    %48 = memref.load %arg4[%c2_23, %c0_24] : memref<10x1xf32, #tpu.memory_space<smem>>
    %49 = vector.broadcast %48 : f32 to vector<1x8xf32>
    %50 = arith.mulf %47, %49 : vector<1x8xf32>
    %51 = arith.addf %35, %50 : vector<1x8xf32>
    %c0_25 = arith.constant 0 : index
    %c3 = arith.constant 3 : index
    %52 = memref.load %arg2[%c0_25, %c3] : memref<2x10xf32, #tpu.memory_space<smem>>
    %53 = vector.broadcast %52 : f32 to vector<1x8xf32>
    %54 = arith.mulf %0, %53 : vector<1x8xf32>
    %c1_26 = arith.constant 1 : index
    %c3_27 = arith.constant 3 : index
    %55 = memref.load %arg2[%c1_26, %c3_27] : memref<2x10xf32, #tpu.memory_space<smem>>
    %56 = vector.broadcast %55 : f32 to vector<1x8xf32>
    %57 = arith.mulf %1, %56 : vector<1x8xf32>
    %58 = arith.addf %54, %57 : vector<1x8xf32>
    %c3_28 = arith.constant 3 : index
    %59 = memref.load %arg3[%c3_28] : memref<10xf32, #tpu.memory_space<smem>>
    %60 = vector.broadcast %59 : f32 to vector<1x8xf32>
    %61 = arith.addf %58, %60 : vector<1x8xf32>
    %cst_29 = arith.constant 0.000000e+00 : f32
    %62 = vector.broadcast %cst_29 : f32 to vector<1x8xf32>
    %63 = arith.maximumf %61, %62 : vector<1x8xf32>
    %c3_30 = arith.constant 3 : index
    %c0_31 = arith.constant 0 : index
    %64 = memref.load %arg4[%c3_30, %c0_31] : memref<10x1xf32, #tpu.memory_space<smem>>
    %65 = vector.broadcast %64 : f32 to vector<1x8xf32>
    %66 = arith.mulf %63, %65 : vector<1x8xf32>
    %67 = arith.addf %51, %66 : vector<1x8xf32>
    %c0_32 = arith.constant 0 : index
    %c4 = arith.constant 4 : index
    %68 = memref.load %arg2[%c0_32, %c4] : memref<2x10xf32, #tpu.memory_space<smem>>
    %69 = vector.broadcast %68 : f32 to vector<1x8xf32>
    %70 = arith.mulf %0, %69 : vector<1x8xf32>
    %c1_33 = arith.constant 1 : index
    %c4_34 = arith.constant 4 : index
    %71 = memref.load %arg2[%c1_33, %c4_34] : memref<2x10xf32, #tpu.memory_space<smem>>
    %72 = vector.broadcast %71 : f32 to vector<1x8xf32>
    %73 = arith.mulf %1, %72 : vector<1x8xf32>
    %74 = arith.addf %70, %73 : vector<1x8xf32>
    %c4_35 = arith.constant 4 : index
    %75 = memref.load %arg3[%c4_35] : memref<10xf32, #tpu.memory_space<smem>>
    %76 = vector.broadcast %75 : f32 to vector<1x8xf32>
    %77 = arith.addf %74, %76 : vector<1x8xf32>
    %cst_36 = arith.constant 0.000000e+00 : f32
    %78 = vector.broadcast %cst_36 : f32 to vector<1x8xf32>
    %79 = arith.maximumf %77, %78 : vector<1x8xf32>
    %c4_37 = arith.constant 4 : index
    %c0_38 = arith.constant 0 : index
    %80 = memref.load %arg4[%c4_37, %c0_38] : memref<10x1xf32, #tpu.memory_space<smem>>
    %81 = vector.broadcast %80 : f32 to vector<1x8xf32>
    %82 = arith.mulf %79, %81 : vector<1x8xf32>
    %83 = arith.addf %67, %82 : vector<1x8xf32>
    %c0_39 = arith.constant 0 : index
    %c5 = arith.constant 5 : index
    %84 = memref.load %arg2[%c0_39, %c5] : memref<2x10xf32, #tpu.memory_space<smem>>
    %85 = vector.broadcast %84 : f32 to vector<1x8xf32>
    %86 = arith.mulf %0, %85 : vector<1x8xf32>
    %c1_40 = arith.constant 1 : index
    %c5_41 = arith.constant 5 : index
    %87 = memref.load %arg2[%c1_40, %c5_41] : memref<2x10xf32, #tpu.memory_space<smem>>
    %88 = vector.broadcast %87 : f32 to vector<1x8xf32>
    %89 = arith.mulf %1, %88 : vector<1x8xf32>
    %90 = arith.addf %86, %89 : vector<1x8xf32>
    %c5_42 = arith.constant 5 : index
    %91 = memref.load %arg3[%c5_42] : memref<10xf32, #tpu.memory_space<smem>>
    %92 = vector.broadcast %91 : f32 to vector<1x8xf32>
    %93 = arith.addf %90, %92 : vector<1x8xf32>
    %cst_43 = arith.constant 0.000000e+00 : f32
    %94 = vector.broadcast %cst_43 : f32 to vector<1x8xf32>
    %95 = arith.maximumf %93, %94 : vector<1x8xf32>
    %c5_44 = arith.constant 5 : index
    %c0_45 = arith.constant 0 : index
    %96 = memref.load %arg4[%c5_44, %c0_45] : memref<10x1xf32, #tpu.memory_space<smem>>
    %97 = vector.broadcast %96 : f32 to vector<1x8xf32>
    %98 = arith.mulf %95, %97 : vector<1x8xf32>
    %99 = arith.addf %83, %98 : vector<1x8xf32>
    %c0_46 = arith.constant 0 : index
    %c6 = arith.constant 6 : index
    %100 = memref.load %arg2[%c0_46, %c6] : memref<2x10xf32, #tpu.memory_space<smem>>
    %101 = vector.broadcast %100 : f32 to vector<1x8xf32>
    %102 = arith.mulf %0, %101 : vector<1x8xf32>
    %c1_47 = arith.constant 1 : index
    %c6_48 = arith.constant 6 : index
    %103 = memref.load %arg2[%c1_47, %c6_48] : memref<2x10xf32, #tpu.memory_space<smem>>
    %104 = vector.broadcast %103 : f32 to vector<1x8xf32>
    %105 = arith.mulf %1, %104 : vector<1x8xf32>
    %106 = arith.addf %102, %105 : vector<1x8xf32>
    %c6_49 = arith.constant 6 : index
    %107 = memref.load %arg3[%c6_49] : memref<10xf32, #tpu.memory_space<smem>>
    %108 = vector.broadcast %107 : f32 to vector<1x8xf32>
    %109 = arith.addf %106, %108 : vector<1x8xf32>
    %cst_50 = arith.constant 0.000000e+00 : f32
    %110 = vector.broadcast %cst_50 : f32 to vector<1x8xf32>
    %111 = arith.maximumf %109, %110 : vector<1x8xf32>
    %c6_51 = arith.constant 6 : index
    %c0_52 = arith.constant 0 : index
    %112 = memref.load %arg4[%c6_51, %c0_52] : memref<10x1xf32, #tpu.memory_space<smem>>
    %113 = vector.broadcast %112 : f32 to vector<1x8xf32>
    %114 = arith.mulf %111, %113 : vector<1x8xf32>
    %115 = arith.addf %99, %114 : vector<1x8xf32>
    %c0_53 = arith.constant 0 : index
    %c7 = arith.constant 7 : index
    %116 = memref.load %arg2[%c0_53, %c7] : memref<2x10xf32, #tpu.memory_space<smem>>
    %117 = vector.broadcast %116 : f32 to vector<1x8xf32>
    %118 = arith.mulf %0, %117 : vector<1x8xf32>
    %c1_54 = arith.constant 1 : index
    %c7_55 = arith.constant 7 : index
    %119 = memref.load %arg2[%c1_54, %c7_55] : memref<2x10xf32, #tpu.memory_space<smem>>
    %120 = vector.broadcast %119 : f32 to vector<1x8xf32>
    %121 = arith.mulf %1, %120 : vector<1x8xf32>
    %122 = arith.addf %118, %121 : vector<1x8xf32>
    %c7_56 = arith.constant 7 : index
    %123 = memref.load %arg3[%c7_56] : memref<10xf32, #tpu.memory_space<smem>>
    %124 = vector.broadcast %123 : f32 to vector<1x8xf32>
    %125 = arith.addf %122, %124 : vector<1x8xf32>
    %cst_57 = arith.constant 0.000000e+00 : f32
    %126 = vector.broadcast %cst_57 : f32 to vector<1x8xf32>
    %127 = arith.maximumf %125, %126 : vector<1x8xf32>
    %c7_58 = arith.constant 7 : index
    %c0_59 = arith.constant 0 : index
    %128 = memref.load %arg4[%c7_58, %c0_59] : memref<10x1xf32, #tpu.memory_space<smem>>
    %129 = vector.broadcast %128 : f32 to vector<1x8xf32>
    %130 = arith.mulf %127, %129 : vector<1x8xf32>
    %131 = arith.addf %115, %130 : vector<1x8xf32>
    %c0_60 = arith.constant 0 : index
    %c8 = arith.constant 8 : index
    %132 = memref.load %arg2[%c0_60, %c8] : memref<2x10xf32, #tpu.memory_space<smem>>
    %133 = vector.broadcast %132 : f32 to vector<1x8xf32>
    %134 = arith.mulf %0, %133 : vector<1x8xf32>
    %c1_61 = arith.constant 1 : index
    %c8_62 = arith.constant 8 : index
    %135 = memref.load %arg2[%c1_61, %c8_62] : memref<2x10xf32, #tpu.memory_space<smem>>
    %136 = vector.broadcast %135 : f32 to vector<1x8xf32>
    %137 = arith.mulf %1, %136 : vector<1x8xf32>
    %138 = arith.addf %134, %137 : vector<1x8xf32>
    %c8_63 = arith.constant 8 : index
    %139 = memref.load %arg3[%c8_63] : memref<10xf32, #tpu.memory_space<smem>>
    %140 = vector.broadcast %139 : f32 to vector<1x8xf32>
    %141 = arith.addf %138, %140 : vector<1x8xf32>
    %cst_64 = arith.constant 0.000000e+00 : f32
    %142 = vector.broadcast %cst_64 : f32 to vector<1x8xf32>
    %143 = arith.maximumf %141, %142 : vector<1x8xf32>
    %c8_65 = arith.constant 8 : index
    %c0_66 = arith.constant 0 : index
    %144 = memref.load %arg4[%c8_65, %c0_66] : memref<10x1xf32, #tpu.memory_space<smem>>
    %145 = vector.broadcast %144 : f32 to vector<1x8xf32>
    %146 = arith.mulf %143, %145 : vector<1x8xf32>
    %147 = arith.addf %131, %146 : vector<1x8xf32>
    %c0_67 = arith.constant 0 : index
    %c9 = arith.constant 9 : index
    %148 = memref.load %arg2[%c0_67, %c9] : memref<2x10xf32, #tpu.memory_space<smem>>
    %149 = vector.broadcast %148 : f32 to vector<1x8xf32>
    %150 = arith.mulf %0, %149 : vector<1x8xf32>
    %c1_68 = arith.constant 1 : index
    %c9_69 = arith.constant 9 : index
    %151 = memref.load %arg2[%c1_68, %c9_69] : memref<2x10xf32, #tpu.memory_space<smem>>
    %152 = vector.broadcast %151 : f32 to vector<1x8xf32>
    %153 = arith.mulf %1, %152 : vector<1x8xf32>
    %154 = arith.addf %150, %153 : vector<1x8xf32>
    %c9_70 = arith.constant 9 : index
    %155 = memref.load %arg3[%c9_70] : memref<10xf32, #tpu.memory_space<smem>>
    %156 = vector.broadcast %155 : f32 to vector<1x8xf32>
    %157 = arith.addf %154, %156 : vector<1x8xf32>
    %cst_71 = arith.constant 0.000000e+00 : f32
    %158 = vector.broadcast %cst_71 : f32 to vector<1x8xf32>
    %159 = arith.maximumf %157, %158 : vector<1x8xf32>
    %c9_72 = arith.constant 9 : index
    %c0_73 = arith.constant 0 : index
    %160 = memref.load %arg4[%c9_72, %c0_73] : memref<10x1xf32, #tpu.memory_space<smem>>
    %161 = vector.broadcast %160 : f32 to vector<1x8xf32>
    %162 = arith.mulf %159, %161 : vector<1x8xf32>
    %163 = arith.addf %147, %162 : vector<1x8xf32>
    %c0_74 = arith.constant 0 : index
    %c0_75 = arith.constant 0 : index
    %164 = vector.load %arg6[%c0_74, %c0_75] : memref<1x8xf32, #tpu.memory_space<vmem>>, vector<1x8xf32>
    tpu.vector_store %arg6[%c0_74, %c0_75], %163 {strides = array<i32>} : memref<1x8xf32, #tpu.memory_space<vmem>>, vector<1x8xf32>,
    return
  }
  func.func @transform_0(%arg0: i32) -> (i32, i32) {
    %c0_i32 = arith.constant 0 : i32
    %c0_i32_0 = arith.constant 0 : i32
    return %c0_i32, %arg0 : i32, i32
  }
  func.func @transform_1(%arg0: i32) -> (i32, i32) {
    %c0_i32 = arith.constant 0 : i32
    %c0_i32_0 = arith.constant 0 : i32
    %c0_i32_1 = arith.constant 0 : i32
    return %c0_i32, %c0_i32_0 : i32, i32
  }
  func.func @transform_2(%arg0: i32) -> i32 {
    %c0_i32 = arith.constant 0 : i32
    %c0_i32_0 = arith.constant 0 : i32
    return %c0_i32 : i32
  }
  func.func @transform_3(%arg0: i32) -> (i32, i32) {
    %c0_i32 = arith.constant 0 : i32
    %c0_i32_0 = arith.constant 0 : i32
    %c0_i32_1 = arith.constant 0 : i32
    return %c0_i32, %c0_i32_0 : i32, i32
  }
  func.func @transform_4(%arg0: i32) -> i32 {
    %c0_i32 = arith.constant 0 : i32
    %c0_i32_0 = arith.constant 0 : i32
    return %c0_i32 : i32
  }
  func.func @transform_5(%arg0: i32) -> (i32, i32) {
    %c0_i32 = arith.constant 0 : i32
    %c0_i32_0 = arith.constant 0 : i32
    return %c0_i32, %arg0 : i32, i32
  }
}

</mosaic_0001>

<llo_original>
// kernel: tpu_custom_call.1
$region0: #{tpu_custom_call.1}
  #allocation0 [shape = 'u32[]', space=smem, size = 0x4, offset = 0x4, fixed_abs, tag = 'smem constant byte address 0x4 - core index']
  #allocation1 [shape = 'u32[144,128]{1,0:T(1,128)}', space=vmem, size = 0x12000, scoped, tag = 'internal scratch']
  #allocation2 [shape = 'f32[1]{0:T(128)S(6)}', space=smem, size = 0x200, scoped, tag = 'scoped memory for tpu_custom_call.1']
  %s0 = inlined_call_operand.vmem [shape: f32[2,8], index: 0, kind: input, shape index: {}]
  %s1 = inlined_call_operand.vmem [shape: f32[2,10], index: 1, kind: input, shape index: {}]
  %s2 = inlined_call_operand.vmem [shape: f32[10], index: 2, kind: input, shape index: {}]
  %s3 = inlined_call_operand.vmem [shape: f32[10,1], index: 3, kind: input, shape index: {}]
  %s4 = inlined_call_operand.<no memory space> [shape: f32[1], index: 4, kind: input, shape index: {}]
  %s5 = inlined_call_operand.hbm [shape: f32[1,8], index: 5, kind: output, shape index: {}]
  %s6 = sld [smem:[#allocation0]]
  $region42: #{tpu_custom_call.1} parent=0
    _
  %s8 = ssub.s32 1, %s6
  %s9 = scalar_select 0, %s8, %s6
  %10 = sst [smem:[#allocation2]] %s4
  $region1: #{tpu_custom_call.1} parent=0
    #allocation3 [shape = 'u8[1024]{0}', space=smem, size = 0x400, scoped, tag = 'input window, operand 1, single buffered']
    #allocation4 [shape = 's32[1]{0}', space=sflag, size = 0x4, scoped, tag = 'scoped memory for tpu_custom_call.1']
    #allocation5 [shape = 's32[1]{0}', space=sflag, size = 0x4, scoped, tag = 'scoped memory for tpu_custom_call.1']
    #allocation6 [shape = 'u8[512]{0}', space=smem, size = 0x200, scoped, tag = 'input window, operand 2, single buffered']
    #allocation7 [shape = 's32[1]{0}', space=sflag, size = 0x4, scoped, tag = 'scoped memory for tpu_custom_call.1']
    #allocation8 [shape = 'u8[8192]{0}', space=smem, size = 0x2000, scoped, tag = 'input window, operand 3, single buffered']
    #allocation9 [shape = 'u8[512]{0}', space=vmem, size = 0x400, scoped, tag = 'output window, operand 0, single buffered']
    %11 = vsyncpa [#allocation5], 0
    %12 = vsyncpa [#allocation7], 0
    %13 = vsyncpa [#allocation4], 0
    // Predicated region
    $region2: #{tpu_custom_call.1} parent=1 // pred_check
      _
    $region3: #{tpu_custom_call.1} parent=1 // pred_check_branch
      %15 = sbr.rel (0) target = $region5
    $region4: #{tpu_custom_call.1} parent=1 // pred_region
      _
    $region5: #{tpu_custom_call.1} parent=1 // pred_fallthru
      _
    // Predicated region
    $region6: #{tpu_custom_call.1} parent=1 // pred_check
      _
    $region7: #{tpu_custom_call.1} parent=1 // pred_check_branch
      %17 = sbr.rel (0) target = $region9
    $region8: #{tpu_custom_call.1} parent=1 // pred_region
      %s19 = ssub.s32 32, 32
      %20 = vsyncadd [#allocation5], %s19
      %s22 = sshll.u32 %s1, 4
      %s23 = int_to_ptr.vmem [resolvable:$true] %s22
      %25 = dma.vmem_to_smem %s23, 32, [#allocation3], [#allocation5]
    $region9: #{tpu_custom_call.1} parent=1 // pred_fallthru
      _
    // Predicated region
    $region10: #{tpu_custom_call.1} parent=1 // pred_check
      _
    $region11: #{tpu_custom_call.1} parent=1 // pred_check_branch
      %27 = sbr.rel (0) target = $region13
    $region12: #{tpu_custom_call.1} parent=1 // pred_region
      %s29 = ssub.s32 16, 16
      %30 = vsyncadd [#allocation7], %s29
      %s32 = sshll.u32 %s2, 4
      %s33 = int_to_ptr.vmem [resolvable:$true] %s32
      %35 = dma.vmem_to_smem %s33, 16, [#allocation6], [#allocation7]
    $region13: #{tpu_custom_call.1} parent=1 // pred_fallthru
      _
    // Predicated region
    $region14: #{tpu_custom_call.1} parent=1 // pred_check
      _
    $region15: #{tpu_custom_call.1} parent=1 // pred_check_branch
      %37 = sbr.rel (0) target = $region17
    $region16: #{tpu_custom_call.1} parent=1 // pred_region
      %s39 = ssub.s32 256, 256
      %40 = vsyncadd [#allocation7], %s39
      %s41 = sshll.u32 %s3, 4
      %s42 = int_to_ptr.vmem [resolvable:$true] %s41
      %47 = dma.vmem_to_smem %s42, 256, [#allocation8], [#allocation7], 128, 128, 8
    $region17: #{tpu_custom_call.1} parent=1 // pred_fallthru
      _
    // Predicated region
    $region18: #{tpu_custom_call.1} parent=1 // pred_check
      _
    $region19: #{tpu_custom_call.1} parent=1 // pred_check_branch
      %49 = sbr.rel (0) target = $region21
    $region20: #{tpu_custom_call.1} parent=1 // pred_region
      _
    $region21: #{tpu_custom_call.1} parent=1 // pred_fallthru
      _
    // Predicated region
    $region22: #{tpu_custom_call.1} parent=1 // pred_check
      _
    $region23: #{tpu_custom_call.1} parent=1 // pred_check_branch
      %51 = sbr.rel (0) target = $region25
    $region24: #{tpu_custom_call.1} parent=1 // pred_region
      %52 = dma.done [#allocation5], 32
    $region25: #{tpu_custom_call.1} parent=1 // pred_fallthru
      _
    // Predicated region
    $region26: #{tpu_custom_call.1} parent=1 // pred_check
      _
    $region27: #{tpu_custom_call.1} parent=1 // pred_check_branch
      %54 = sbr.rel (0) target = $region29
    $region28: #{tpu_custom_call.1} parent=1 // pred_region
      %55 = dma.done [#allocation7], 16
    $region29: #{tpu_custom_call.1} parent=1 // pred_fallthru
      _
    // Predicated region
    $region30: #{tpu_custom_call.1} parent=1 // pred_check
      _
    $region31: #{tpu_custom_call.1} parent=1 // pred_check_branch
      %57 = sbr.rel (0) target = $region33
    $region32: #{tpu_custom_call.1} parent=1 // pred_region
      %58 = dma.done [#allocation7], 256
    $region33: #{tpu_custom_call.1} parent=1 // pred_fallthru
      _
    %59 = sfence
    %v60 = vld [vmem:[%s0] sm:$0x1]
    %v61 = vld [vmem:[%s0 + $0x1] sm:$0x1]
    %s62 = sld [smem:[#allocation2]]
    %v63 = vstv %s62
    %s64 = sld [smem:[#allocation3]]
    %v65 = vstv %s64
    %v66 = vmul.f32 %v60, %v65
    %s67 = sld [smem:[#allocation3 + $0x80]]
    %v68 = vstv %s67
    %v69 = vmul.f32 %v61, %v68
    %v70 = vadd.f32 %v66, %v69
    %s71 = sld [smem:[#allocation6]]
    %v72 = vstv %s71
    %v73 = vadd.f32 %v70, %v72
    %v74 = vmax.f32 %v73, 0.0
    %s75 = sld [smem:[#allocation8]]
    %v76 = vstv %s75
    %v77 = vmul.f32 %v74, %v76
    %v78 = vadd.f32 %v63, %v77
    %s79 = sld [smem:[#allocation3 + $0x1]]
    %v80 = vstv %s79
    %v81 = vmul.f32 %v60, %v80
    %s82 = sld [smem:[#allocation3 + $0x81]]
    %v83 = vstv %s82
    %v84 = vmul.f32 %v61, %v83
    %v85 = vadd.f32 %v81, %v84
    %s86 = sld [smem:[#allocation6 + $0x1]]
    %v87 = vstv %s86
    %v88 = vadd.f32 %v85, %v87
    %v89 = vmax.f32 %v88, 0.0
    %s90 = sld [smem:[#allocation8 + $0x80]]
    %v91 = vstv %s90
    %v92 = vmul.f32 %v89, %v91
    %v93 = vadd.f32 %v78, %v92
    %s94 = sld [smem:[#allocation3 + $0x2]]
    %v95 = vstv %s94
    %v96 = vmul.f32 %v60, %v95
    %s97 = sld [smem:[#allocation3 + $0x82]]
    %v98 = vstv %s97
    %v99 = vmul.f32 %v61, %v98
    %v100 = vadd.f32 %v96, %v99
    %s101 = sld [smem:[#allocation6 + $0x2]]
    %v102 = vstv %s101
    %v103 = vadd.f32 %v100, %v102
    %v104 = vmax.f32 %v103, 0.0
    %s105 = sld [smem:[#allocation8 + $0x100]]
    %v106 = vstv %s105
    %v107 = vmul.f32 %v104, %v106
    %v108 = vadd.f32 %v93, %v107
    %s109 = sld [smem:[#allocation3 + $0x3]]
    %v110 = vstv %s109
    %v111 = vmul.f32 %v60, %v110
    %s112 = sld [smem:[#allocation3 + $0x83]]
    %v113 = vstv %s112
    %v114 = vmul.f32 %v61, %v113
    %v115 = vadd.f32 %v111, %v114
    %s116 = sld [smem:[#allocation6 + $0x3]]
    %v117 = vstv %s116
    %v118 = vadd.f32 %v115, %v117
    %v119 = vmax.f32 %v118, 0.0
    %s120 = sld [smem:[#allocation8 + $0x180]]
    %v121 = vstv %s120
    %v122 = vmul.f32 %v119, %v121
    %v123 = vadd.f32 %v108, %v122
    %s124 = sld [smem:[#allocation3 + $0x4]]
    %v125 = vstv %s124
    %v126 = vmul.f32 %v60, %v125
    %s127 = sld [smem:[#allocation3 + $0x84]]
    %v128 = vstv %s127
    %v129 = vmul.f32 %v61, %v128
    %v130 = vadd.f32 %v126, %v129
    %s131 = sld [smem:[#allocation6 + $0x4]]
    %v132 = vstv %s131
    %v133 = vadd.f32 %v130, %v132
    %v134 = vmax.f32 %v133, 0.0
    %s135 = sld [smem:[#allocation8 + $0x200]]
    %v136 = vstv %s135
    %v137 = vmul.f32 %v134, %v136
    %v138 = vadd.f32 %v123, %v137
    %s139 = sld [smem:[#allocation3 + $0x5]]
    %v140 = vstv %s139
    %v141 = vmul.f32 %v60, %v140
    %s142 = sld [smem:[#allocation3 + $0x85]]
    %v143 = vstv %s142
    %v144 = vmul.f32 %v61, %v143
    %v145 = vadd.f32 %v141, %v144
    %s146 = sld [smem:[#allocation6 + $0x5]]
    %v147 = vstv %s146
    %v148 = vadd.f32 %v145, %v147
    %v149 = vmax.f32 %v148, 0.0
    %s150 = sld [smem:[#allocation8 + $0x280]]
    %v151 = vstv %s150
    %v152 = vmul.f32 %v149, %v151
    %v153 = vadd.f32 %v138, %v152
    %s154 = sld [smem:[#allocation3 + $0x6]]
    %v155 = vstv %s154
    %v156 = vmul.f32 %v60, %v155
    %s157 = sld [smem:[#allocation3 + $0x86]]
    %v158 = vstv %s157
    %v159 = vmul.f32 %v61, %v158
    %v160 = vadd.f32 %v156, %v159
    %s161 = sld [smem:[#allocation6 + $0x6]]
    %v162 = vstv %s161
    %v163 = vadd.f32 %v160, %v162
    %v164 = vmax.f32 %v163, 0.0
    %s165 = sld [smem:[#allocation8 + $0x300]]
    %v166 = vstv %s165
    %v167 = vmul.f32 %v164, %v166
    %v168 = vadd.f32 %v153, %v167
    %s169 = sld [smem:[#allocation3 + $0x7]]
    %v170 = vstv %s169
    %v171 = vmul.f32 %v60, %v170
    %s172 = sld [smem:[#allocation3 + $0x87]]
    %v173 = vstv %s172
    %v174 = vmul.f32 %v61, %v173
    %v175 = vadd.f32 %v171, %v174
    %s176 = sld [smem:[#allocation6 + $0x7]]
    %v177 = vstv %s176
    %v178 = vadd.f32 %v175, %v177
    %v179 = vmax.f32 %v178, 0.0
    %s180 = sld [smem:[#allocation8 + $0x380]]
    %v181 = vstv %s180
    %v182 = vmul.f32 %v179, %v181
    %v183 = vadd.f32 %v168, %v182
    %s184 = sld [smem:[#allocation3 + $0x8]]
    %v185 = vstv %s184
    %v186 = vmul.f32 %v60, %v185
    %s187 = sld [smem:[#allocation3 + $0x88]]
    %v188 = vstv %s187
    %v189 = vmul.f32 %v61, %v188
    %v190 = vadd.f32 %v186, %v189
    %s191 = sld [smem:[#allocation6 + $0x8]]
    %v192 = vstv %s191
    %v193 = vadd.f32 %v190, %v192
    %v194 = vmax.f32 %v193, 0.0
    %s195 = sld [smem:[#allocation8 + $0x400]]
    %v196 = vstv %s195
    %v197 = vmul.f32 %v194, %v196
    %v198 = vadd.f32 %v183, %v197
    %s199 = sld [smem:[#allocation3 + $0x9]]
    %v200 = vstv %s199
    %v201 = vmul.f32 %v60, %v200
    %s202 = sld [smem:[#allocation3 + $0x89]]
    %v203 = vstv %s202
    %v204 = vmul.f32 %v61, %v203
    %v205 = vadd.f32 %v201, %v204
    %s206 = sld [smem:[#allocation6 + $0x9]]
    %v207 = vstv %s206
    %v208 = vadd.f32 %v205, %v207
    %v209 = vmax.f32 %v208, 0.0
    %s210 = sld [smem:[#allocation8 + $0x480]]
    %v211 = vstv %s210
    %v212 = vmul.f32 %v209, %v211
    %v213 = vadd.f32 %v198, %v212
    %vm214 = vcmask 57344
    %215 = vst.msk [vmem:[#allocation9] sm:$0x1] %vm214, %v213
    // Predicated region
    $region34: #{tpu_custom_call.1} parent=1 // pred_check
      _
    $region35: #{tpu_custom_call.1} parent=1 // pred_check_branch
      %217 = sbr.rel (0) target = $region37
    $region36: #{tpu_custom_call.1} parent=1 // pred_region
      %s219 = ssub.s32 16, 16
      %220 = vsyncadd [#allocation4], %s219
      %s222 = sshll.u32 [#allocation9], 4
      %s223 = int_to_ptr.vmem [resolvable:$true] %s222
      %225 = dma.vmem_to_hbm [thread:$0]  %s223, 16, %s5, [#allocation4]
    $region37: #{tpu_custom_call.1} parent=1 // pred_fallthru
      _
    // Predicated region
    $region38: #{tpu_custom_call.1} parent=1 // pred_check
      _
    $region39: #{tpu_custom_call.1} parent=1 // pred_check_branch
      %227 = sbr.rel (0) target = $region41
    $region40: #{tpu_custom_call.1} parent=1 // pred_region
      %228 = dma.done [#allocation4], 16
    $region41: #{tpu_custom_call.1} parent=1 // pred_fallthru
      _
    %229 = vsyncpa [#allocation4], 1
    %230 = vsyncpa [#allocation5], 1
    %231 = vsyncpa [#allocation7], 1

</llo_original>
